<compile_context>
chip_gen: v7x
topology: tpu7x:2x2x1
jax: 0.10.0
libtpu: 0.0.40
codegen_flags: <defaults>
</compile_context>

<pallas_src>
import math

import jax
import jax.numpy as jnp
from jax.experimental import pallas as pl
from jax.experimental.pallas import tpu as pltpu

_PACK = 8  # batch rows packed per lane-row (32 features * 8 = 256 lanes)


def _mish(y):
    # mish(y) = y * tanh(softplus(y)).  With e = exp(y):
    #   tanh(softplus(y)) = ((1+e)^2 - 1) / ((1+e)^2 + 1)
    # Only two EUP transcendentals (exp + approx reciprocal); the rest is VPU work.
    e = jnp.exp(jnp.minimum(y, 20.0))
    n = (1.0 + e) * (1.0 + e)
    d = n + 1.0
    r = pl.reciprocal(d, approx=True)
    r = r * (2.0 - d * r)            # one Newton step on the VPU -> ~f32 precision
    t = (n - 1.0) * r
    # PyTorch softplus threshold convention: for y > 20, softplus(y) ~= y, tanh -> 1.
    return jnp.where(y > 20.0, y, y * t)


def _fused_mlp_kernel(x_ref, w1_ref, b1_ref, w2_ref, b2_ref, w3_ref, b3_ref, o_ref):
    """Linear -> Mish -> Linear -> Mish -> Linear, fully fused for one batch tile."""
    x = x_ref[...].astype(jnp.float32)

    h = jnp.dot(x, w1_ref[...].astype(jnp.float32),
                preferred_element_type=jnp.float32) + b1_ref[...].astype(jnp.float32)
    h = _mish(h)

    h = jnp.dot(h, w2_ref[...].astype(jnp.float32),
                preferred_element_type=jnp.float32) + b2_ref[...].astype(jnp.float32)
    h = _mish(h)

    y = jnp.dot(h, w3_ref[...].astype(jnp.float32),
                preferred_element_type=jnp.float32) + b3_ref[...].astype(jnp.float32)

    o_ref[...] = y.astype(o_ref.dtype)


def _pack_params(params):
    """Block-diagonal (kron(I_PACK, W)) weights + tiled biases for the packed layout."""
    packed = []
    for w, b in params:
        eye = jnp.eye(_PACK, dtype=w.dtype)
        wp = jnp.kron(eye, w)           # [PACK*fin, PACK*fout], block-diagonal
        bp = jnp.tile(b, (1, _PACK))    # [1, PACK*fout]
        packed.append((wp, bp))
    return packed


def mlp_forward(x, params, *, batch_tile=1024):
    """Fused 3-layer MLP forward (Mish on hidden layers, identity output).

    x: [B, F0] float32; params: [(w1,b1),(w2,b2),(w3,b3)] with w_i: [F_{i-1}, F_i],
    b_i: [1, F_i].  `batch_tile` is measured in *packed* rows (1 packed row = 8 batch
    rows), so the default 1024 streams 8192 batch rows (~1 MB of x) per grid step.
    """
    assert len(params) == 3, "this fused kernel implements the 3-linear-layer MLP"
    (w1, _), (_, _), (w3, _) = params
    B, F0 = x.shape
    assert w1.shape[0] == F0
    out_dim = w3.shape[1]

    # --- lane-dense packing: 8 batch rows per 256-lane row -----------------------
    Bp = -(-B // _PACK) * _PACK
    if Bp != B:
        x = jnp.pad(x, ((0, Bp - B), (0, 0)))
    rows = Bp // _PACK
    xp = x.reshape(rows, _PACK * F0)

    (w1p, b1p), (w2p, b2p), (w3p, b3p) = _pack_params(params)
    args = (xp, w1p, b1p, w2p, b2p, w3p, b3p)
    out_packed_shape = jax.ShapeDtypeStruct((rows, _PACK * out_dim), x.dtype)

    if rows >= 2 * batch_tile:
        # --- streaming path: tile the batch, keep weights/biases VMEM-resident ---
        steps = -(-rows // batch_tile)
        if steps % 2:                 # keep v7x's two TensorCores balanced
            steps += 1
        tile = -(-rows // steps)
        tile = -(-tile // 8) * 8      # sublane multiple
        grid = (pl.cdiv(rows, tile),)

        full = lambda i: (0, 0)       # weights/biases: same block every step (resident)
        in_specs = [
            pl.BlockSpec((tile, _PACK * F0), lambda i: (i, 0)),   # x tile streams
            pl.BlockSpec(w1p.shape, full),
            pl.BlockSpec(b1p.shape, full),
            pl.BlockSpec(w2p.shape, full),
            pl.BlockSpec(b2p.shape, full),
            pl.BlockSpec(w3p.shape, full),
            pl.BlockSpec(b3p.shape, full),
        ]
        out_specs = pl.BlockSpec((tile, _PACK * out_dim), lambda i: (i, 0))

        yp = pl.pallas_call(
            _fused_mlp_kernel,
            out_shape=out_packed_shape,
            grid=grid,
            in_specs=in_specs,
            out_specs=out_specs,
            compiler_params=pltpu.CompilerParams(
                dimension_semantics=("parallel",),   # shard batch over v7x's 2 TCs
            ),
        )(*args)
    else:
        # --- single-block path: whole problem in VMEM, no grid / no pipeline -----
        vmem = pltpu.MemorySpace.VMEM
        yp = pl.pallas_call(
            _fused_mlp_kernel,
            out_shape=out_packed_shape,
            in_specs=[pl.BlockSpec(memory_space=vmem)] * 7,
            out_specs=pl.BlockSpec(memory_space=vmem),
        )(*args)

    y = yp.reshape(Bp, out_dim)
    return y[:B] if Bp != B else y


def init_mlp_params(key, features):
    """Deterministic init mimicking nn.Linear defaults: U(-1/sqrt(fan_in), 1/sqrt(fan_in))."""
    params = []
    for i in range(1, len(features)):
        fan_in, fan_out = features[i - 1], features[i]
        key, kw, kb = jax.random.split(key, 3)
        bound = 1.0 / math.sqrt(fan_in)
        w = jax.random.uniform(kw, (fan_in, fan_out), jnp.float32, -bound, bound)
        b = jax.random.uniform(kb, (1, fan_out), jnp.float32, -bound, bound)
        params.append((w, b))
    return params


def ref_forward(x, params):
    """Pure-JAX reference (Mish on hidden layers, identity output)."""
    n = len(params)
    for i, (w, b) in enumerate(params):
        y = jnp.dot(x, w, preferred_element_type=jnp.float32) + b
        if i < n - 1:
            y = y * jnp.tanh(jax.nn.softplus(y))
        x = y
    return x


if __name__ == "__main__":
    key = jax.random.PRNGKey(0)
    features = [32, 64, 48, 16]
    kp, k1, k2, k3 = jax.random.split(key, 4)
    params = init_mlp_params(kp, features)

    # 1) tiny batch (padded to a multiple of 8) -> single-block, no-grid path.
    x1 = jax.random.normal(k1, (2, features[0]), jnp.float32)
    o1 = jax.block_until_ready(mlp_forward(x1, params))
    r1 = ref_forward(x1, params)
    assert o1.shape == (2, features[-1])
    assert jnp.allclose(o1, r1, atol=1e-4, rtol=1e-4), "tiny-batch mismatch vs reference"

    # 2) moderate batch -> still one fused VMEM block, zero pipeline overhead.
    x2 = jax.random.normal(k2, (512, features[0]), jnp.float32)
    o2 = jax.block_until_ready(mlp_forward(x2, params))
    r2 = ref_forward(x2, params)
    assert o2.shape == (512, features[-1])
    assert jnp.allclose(o2, r2, atol=1e-4, rtol=1e-4), "moderate-batch mismatch vs reference"

    # 3) streaming path (small batch_tile override to exercise it at test scale):
    #    B=996 is not a multiple of 8 and the grid has a partial last tile.
    x3 = jax.random.normal(k3, (996, features[0]), jnp.float32)
    o3 = jax.block_until_ready(mlp_forward(x3, params, batch_tile=32))
    r3 = ref_forward(x3, params)
    assert o3.shape == (996, features[-1])
    assert jnp.allclose(o3, r3, atol=1e-4, rtol=1e-4), "streaming-path mismatch vs reference"

    print("KERNEL_OK")
</pallas_src>

<mosaic_0001>
module attributes {stable_mosaic.version = 11 : i64} {
  func.func @_fused_mlp_kernel(%arg0: memref<1x256xf32, #tpu.memory_space<vmem>>, %arg1: memref<256x512xf32, #tpu.memory_space<vmem>>, %arg2: memref<1x512xf32, #tpu.memory_space<vmem>>, %arg3: memref<512x384xf32, #tpu.memory_space<vmem>>, %arg4: memref<1x384xf32, #tpu.memory_space<vmem>>, %arg5: memref<384x128xf32, #tpu.memory_space<vmem>>, %arg6: memref<1x128xf32, #tpu.memory_space<vmem>>, %arg7: memref<1x128xf32, #tpu.memory_space<vmem>>) attributes {dimension_semantics = [], scalar_prefetch = 0 : i64, scratch_operands = 0 : i64, tpu.core_type = #tpu.core_type<tc>} {
    %c0 = arith.constant 0 : index
    %c0_0 = arith.constant 0 : index
    %0 = vector.load %arg0[%c0, %c0_0] : memref<1x256xf32, #tpu.memory_space<vmem>>, vector<1x256xf32>
    %c0_1 = arith.constant 0 : index
    %c0_2 = arith.constant 0 : index
    %1 = vector.load %arg1[%c0_1, %c0_2] : memref<256x512xf32, #tpu.memory_space<vmem>>, vector<256x512xf32>
    %cst = arith.constant dense<0.000000e+00> : vector<1x512xf32>
    %2 = tpu.matmul %0, %1, %cst {dimension_numbers = #tpu.dot_dimension_numbers<[1], [0], [0], [1], [0, 0, 1, 1], [], []>} : vector<1x256xf32>, vector<256x512xf32>, vector<1x512xf32> -> vector<1x512xf32>
    %c0_3 = arith.constant 0 : index
    %c0_4 = arith.constant 0 : index
    %3 = vector.load %arg2[%c0_3, %c0_4] : memref<1x512xf32, #tpu.memory_space<vmem>>, vector<1x512xf32>
    %4 = arith.addf %2, %3 : vector<1x512xf32>
    %cst_5 = arith.constant 2.000000e+01 : f32
    %5 = vector.broadcast %cst_5 : f32 to vector<1x512xf32>
    %6 = arith.minimumf %4, %5 : vector<1x512xf32>
    %7 = math.exp %6 : vector<1x512xf32>
    %cst_6 = arith.constant 1.000000e+00 : f32
    %8 = vector.broadcast %cst_6 : f32 to vector<1x512xf32>
    %9 = arith.addf %8, %7 : vector<1x512xf32>
    %cst_7 = arith.constant 1.000000e+00 : f32
    %10 = vector.broadcast %cst_7 : f32 to vector<1x512xf32>
    %11 = arith.addf %10, %7 : vector<1x512xf32>
    %12 = arith.mulf %9, %11 : vector<1x512xf32>
    %cst_8 = arith.constant 1.000000e+00 : f32
    %13 = vector.broadcast %cst_8 : f32 to vector<1x512xf32>
    %14 = arith.addf %12, %13 : vector<1x512xf32>
    %15 = tpu.reciprocal %14 {approx = true} : vector<1x512xf32> -> vector<1x512xf32>
    %16 = arith.mulf %14, %15 : vector<1x512xf32>
    %cst_9 = arith.constant 2.000000e+00 : f32
    %17 = vector.broadcast %cst_9 : f32 to vector<1x512xf32>
    %18 = arith.subf %17, %16 : vector<1x512xf32>
    %19 = arith.mulf %15, %18 : vector<1x512xf32>
    %cst_10 = arith.constant 1.000000e+00 : f32
    %20 = vector.broadcast %cst_10 : f32 to vector<1x512xf32>
    %21 = arith.subf %12, %20 : vector<1x512xf32>
    %22 = arith.mulf %21, %19 : vector<1x512xf32>
    %cst_11 = arith.constant 2.000000e+01 : f32
    %23 = vector.broadcast %cst_11 : f32 to vector<1x512xf32>
    %24 = arith.cmpf ogt, %4, %23 : vector<1x512xf32>
    %25 = arith.mulf %4, %22 : vector<1x512xf32>
    %26 = arith.select %24, %4, %25 : vector<1x512xi1>, vector<1x512xf32>
    %c0_12 = arith.constant 0 : index
    %c0_13 = arith.constant 0 : index
    %27 = vector.load %arg3[%c0_12, %c0_13] : memref<512x384xf32, #tpu.memory_space<vmem>>, vector<512x384xf32>
    %cst_14 = arith.constant dense<0.000000e+00> : vector<1x384xf32>
    %28 = tpu.matmul %26, %27, %cst_14 {dimension_numbers = #tpu.dot_dimension_numbers<[1], [0], [0], [1], [0, 0, 1, 1], [], []>} : vector<1x512xf32>, vector<512x384xf32>, vector<1x384xf32> -> vector<1x384xf32>
    %c0_15 = arith.constant 0 : index
    %c0_16 = arith.constant 0 : index
    %29 = vector.load %arg4[%c0_15, %c0_16] : memref<1x384xf32, #tpu.memory_space<vmem>>, vector<1x384xf32>
    %30 = arith.addf %28, %29 : vector<1x384xf32>
    %cst_17 = arith.constant 2.000000e+01 : f32
    %31 = vector.broadcast %cst_17 : f32 to vector<1x384xf32>
    %32 = arith.minimumf %30, %31 : vector<1x384xf32>
    %33 = math.exp %32 : vector<1x384xf32>
    %cst_18 = arith.constant 1.000000e+00 : f32
    %34 = vector.broadcast %cst_18 : f32 to vector<1x384xf32>
    %35 = arith.addf %34, %33 : vector<1x384xf32>
    %cst_19 = arith.constant 1.000000e+00 : f32
    %36 = vector.broadcast %cst_19 : f32 to vector<1x384xf32>
    %37 = arith.addf %36, %33 : vector<1x384xf32>
    %38 = arith.mulf %35, %37 : vector<1x384xf32>
    %cst_20 = arith.constant 1.000000e+00 : f32
    %39 = vector.broadcast %cst_20 : f32 to vector<1x384xf32>
    %40 = arith.addf %38, %39 : vector<1x384xf32>
    %41 = tpu.reciprocal %40 {approx = true} : vector<1x384xf32> -> vector<1x384xf32>
    %42 = arith.mulf %40, %41 : vector<1x384xf32>
    %cst_21 = arith.constant 2.000000e+00 : f32
    %43 = vector.broadcast %cst_21 : f32 to vector<1x384xf32>
    %44 = arith.subf %43, %42 : vector<1x384xf32>
    %45 = arith.mulf %41, %44 : vector<1x384xf32>
    %cst_22 = arith.constant 1.000000e+00 : f32
    %46 = vector.broadcast %cst_22 : f32 to vector<1x384xf32>
    %47 = arith.subf %38, %46 : vector<1x384xf32>
    %48 = arith.mulf %47, %45 : vector<1x384xf32>
    %cst_23 = arith.constant 2.000000e+01 : f32
    %49 = vector.broadcast %cst_23 : f32 to vector<1x384xf32>
    %50 = arith.cmpf ogt, %30, %49 : vector<1x384xf32>
    %51 = arith.mulf %30, %48 : vector<1x384xf32>
    %52 = arith.select %50, %30, %51 : vector<1x384xi1>, vector<1x384xf32>
    %c0_24 = arith.constant 0 : index
    %c0_25 = arith.constant 0 : index
    %53 = vector.load %arg5[%c0_24, %c0_25] : memref<384x128xf32, #tpu.memory_space<vmem>>, vector<384x128xf32>
    %cst_26 = arith.constant dense<0.000000e+00> : vector<1x128xf32>
    %54 = tpu.matmul %52, %53, %cst_26 {dimension_numbers = #tpu.dot_dimension_numbers<[1], [0], [0], [1], [0, 0, 1, 1], [], []>} : vector<1x384xf32>, vector<384x128xf32>, vector<1x128xf32> -> vector<1x128xf32>
    %c0_27 = arith.constant 0 : index
    %c0_28 = arith.constant 0 : index
    %55 = vector.load %arg6[%c0_27, %c0_28] : memref<1x128xf32, #tpu.memory_space<vmem>>, vector<1x128xf32>
    %56 = arith.addf %54, %55 : vector<1x128xf32>
    %c0_29 = arith.constant 0 : index
    %c0_30 = arith.constant 0 : index
    %57 = vector.load %arg7[%c0_29, %c0_30] : memref<1x128xf32, #tpu.memory_space<vmem>>, vector<1x128xf32>
    tpu.vector_store %arg7[%c0_29, %c0_30], %56 {strides = array<i32>} : memref<1x128xf32, #tpu.memory_space<vmem>>, vector<1x128xf32>,
    return
  }
}

</mosaic_0001>

<llo_original>
// kernel: tpu_custom_call.1
$region0: #{tpu_custom_call.1}
  #allocation0 [shape = 'u32[]', space=smem, size = 0x4, offset = 0x4, fixed_abs, tag = 'smem constant byte address 0x4 - core index']
  #allocation1 [shape = 'u32[144,128]{1,0:T(1,128)}', space=vmem, size = 0x12000, scoped, tag = 'internal scratch']
  %s0 = inlined_call_operand.hbm [shape: f32[1,256], index: 0, kind: input, shape index: {}]
  %s1 = inlined_call_operand.hbm [shape: f32[256,512], index: 1, kind: input, shape index: {}]
  %s2 = inlined_call_operand.vmem [shape: f32[1,512], index: 2, kind: input, shape index: {}]
  %s3 = inlined_call_operand.hbm [shape: f32[512,384], index: 3, kind: input, shape index: {}]
  %s4 = inlined_call_operand.vmem [shape: f32[1,384], index: 4, kind: input, shape index: {}]
  %s5 = inlined_call_operand.hbm [shape: f32[384,128], index: 5, kind: input, shape index: {}]
  %s6 = inlined_call_operand.vmem [shape: f32[1,128], index: 6, kind: input, shape index: {}]
  %s7 = inlined_call_operand.hbm [shape: f32[1,128], index: 7, kind: output, shape index: {}]
  %s8 = sld [smem:[#allocation0]]
  $region54: #{tpu_custom_call.1} parent=0
    _
  %s10 = ssub.s32 1, %s8
  %s11 = scalar_select 0, %s10, %s8
  $region1: #{tpu_custom_call.1} parent=0
    #allocation2 [shape = 'u8[1024]{0}', space=vmem, size = 0x400, scoped, tag = 'input window, operand 0, single buffered']
    #allocation3 [shape = 's32[1]{0}', space=sflag, size = 0x4, scoped, tag = 'scoped memory for tpu_custom_call.1']
    #allocation4 [shape = 's32[1]{0}', space=sflag, size = 0x4, scoped, tag = 'scoped memory for tpu_custom_call.1']
    #allocation5 [shape = 'u8[524288]{0}', space=vmem, size = 0x80000, scoped, tag = 'input window, operand 1, single buffered']
    #allocation6 [shape = 's32[1]{0}', space=sflag, size = 0x4, scoped, tag = 'scoped memory for tpu_custom_call.1']
    #allocation7 [shape = 'u8[786432]{0}', space=vmem, size = 0xc0000, scoped, tag = 'input window, operand 3, single buffered']
    #allocation8 [shape = 'u8[196608]{0}', space=vmem, size = 0x30000, scoped, tag = 'input window, operand 5, single buffered']
    #allocation9 [shape = 's32[1]{0}', space=sflag, size = 0x4, scoped, tag = 'scoped memory for tpu_custom_call.1']
    #allocation10 [shape = 'u8[512]{0}', space=vmem, size = 0x400, scoped, tag = 'output window, operand 0, single buffered']
    %12 = vsyncpa [#allocation3], 0
    %13 = vsyncpa [#allocation6], 0
    %14 = vsyncpa [#allocation9], 0
    %15 = vsyncpa [#allocation4], 0
    // Predicated region
    $region2: #{tpu_custom_call.1} parent=1 // pred_check
      _
    $region3: #{tpu_custom_call.1} parent=1 // pred_check_branch
      %17 = sbr.rel (0) target = $region5
    $region4: #{tpu_custom_call.1} parent=1 // pred_region
      %s19 = ssub.s32 32, 32
      %20 = vsyncadd [#allocation3], %s19
      %s22 = sshll.u32 [#allocation2], 4
      %s23 = int_to_ptr.vmem [resolvable:$true] %s22
      %25 = dma.hbm_to_vmem [thread:$0]  %s0, 32, %s23, [#allocation3]
    $region5: #{tpu_custom_call.1} parent=1 // pred_fallthru
      _
    // Predicated region
    $region6: #{tpu_custom_call.1} parent=1 // pred_check
      _
    $region7: #{tpu_custom_call.1} parent=1 // pred_check_branch
      %27 = sbr.rel (0) target = $region9
    $region8: #{tpu_custom_call.1} parent=1 // pred_region
      %s29 = ssub.s32 16384, 16384
      %30 = vsyncadd [#allocation6], %s29
      %s31 = sshll.u32 [#allocation5], 4
      %s32 = int_to_ptr.vmem [resolvable:$true] %s31
      %37 = dma.hbm_to_vmem [thread:$0]  %s1, 16384, %s32, [#allocation6], 512, 512, 32
    $region9: #{tpu_custom_call.1} parent=1 // pred_fallthru
      _
    // Predicated region
    $region10: #{tpu_custom_call.1} parent=1 // pred_check
      _
    $region11: #{tpu_custom_call.1} parent=1 // pred_check_branch
      %39 = sbr.rel (0) target = $region13
    $region12: #{tpu_custom_call.1} parent=1 // pred_region
      _
    $region13: #{tpu_custom_call.1} parent=1 // pred_fallthru
      _
    // Predicated region
    $region14: #{tpu_custom_call.1} parent=1 // pred_check
      _
    $region15: #{tpu_custom_call.1} parent=1 // pred_check_branch
      %41 = sbr.rel (0) target = $region17
    $region16: #{tpu_custom_call.1} parent=1 // pred_region
      %s43 = ssub.s32 24576, 24576
      %44 = vsyncadd [#allocation6], %s43
      %s45 = sshll.u32 [#allocation7], 4
      %s46 = int_to_ptr.vmem [resolvable:$true] %s45
      %51 = dma.hbm_to_vmem [thread:$0]  %s3, 24576, %s46, [#allocation6], 384, 384, 24
    $region17: #{tpu_custom_call.1} parent=1 // pred_fallthru
      _
    // Predicated region
    $region18: #{tpu_custom_call.1} parent=1 // pred_check
      _
    $region19: #{tpu_custom_call.1} parent=1 // pred_check_branch
      %53 = sbr.rel (0) target = $region21
    $region20: #{tpu_custom_call.1} parent=1 // pred_region
      _
    $region21: #{tpu_custom_call.1} parent=1 // pred_fallthru
      _
    // Predicated region
    $region22: #{tpu_custom_call.1} parent=1 // pred_check
      _
    $region23: #{tpu_custom_call.1} parent=1 // pred_check_branch
      %55 = sbr.rel (0) target = $region25
    $region24: #{tpu_custom_call.1} parent=1 // pred_region
      %s57 = ssub.s32 6144, 6144
      %58 = vsyncadd [#allocation9], %s57
      %s59 = sshll.u32 [#allocation8], 4
      %s60 = int_to_ptr.vmem [resolvable:$true] %s59
      %65 = dma.hbm_to_vmem [thread:$0]  %s5, 6144, %s60, [#allocation9], 128, 128, 8
    $region25: #{tpu_custom_call.1} parent=1 // pred_fallthru
      _
    // Predicated region
    $region26: #{tpu_custom_call.1} parent=1 // pred_check
      _
    $region27: #{tpu_custom_call.1} parent=1 // pred_check_branch
      %67 = sbr.rel (0) target = $region29
    $region28: #{tpu_custom_call.1} parent=1 // pred_region
      _
    $region29: #{tpu_custom_call.1} parent=1 // pred_fallthru
      _
    // Predicated region
    $region30: #{tpu_custom_call.1} parent=1 // pred_check
      _
    $region31: #{tpu_custom_call.1} parent=1 // pred_check_branch
      %69 = sbr.rel (0) target = $region33
    $region32: #{tpu_custom_call.1} parent=1 // pred_region
      %70 = dma.done [#allocation3], 32
    $region33: #{tpu_custom_call.1} parent=1 // pred_fallthru
      _
    // Predicated region
    $region34: #{tpu_custom_call.1} parent=1 // pred_check
      _
    $region35: #{tpu_custom_call.1} parent=1 // pred_check_branch
      %72 = sbr.rel (0) target = $region37
    $region36: #{tpu_custom_call.1} parent=1 // pred_region
      %73 = dma.done [#allocation6], 16384
    $region37: #{tpu_custom_call.1} parent=1 // pred_fallthru
      _
    // Predicated region
    $region38: #{tpu_custom_call.1} parent=1 // pred_check
      _
    $region39: #{tpu_custom_call.1} parent=1 // pred_check_branch
      %75 = sbr.rel (0) target = $region41
    $region40: #{tpu_custom_call.1} parent=1 // pred_region
      %76 = dma.done [#allocation6], 24576
    $region41: #{tpu_custom_call.1} parent=1 // pred_fallthru
      _
    // Predicated region
    $region42: #{tpu_custom_call.1} parent=1 // pred_check
      _
    $region43: #{tpu_custom_call.1} parent=1 // pred_check_branch
      %78 = sbr.rel (0) target = $region45
    $region44: #{tpu_custom_call.1} parent=1 // pred_region
      %79 = dma.done [#allocation9], 6144
    $region45: #{tpu_custom_call.1} parent=1 // pred_fallthru
      _
    %v80 = vld [vmem:[#allocation2] sm:$0x3]
    %v81 = vld [vmem:[#allocation5] sm:$0xff]
    %v82 = vld [vmem:[#allocation5 + $0x8] sm:$0xff]
    %v83 = vld [vmem:[#allocation5 + $0x10] sm:$0xff]
    %v84 = vld [vmem:[#allocation5 + $0x18] sm:$0xff]
    %v85 = vld [vmem:[#allocation5 + $0x20] sm:$0xff]
    %v86 = vld [vmem:[#allocation5 + $0x28] sm:$0xff]
    %v87 = vld [vmem:[#allocation5 + $0x30] sm:$0xff]
    %v88 = vld [vmem:[#allocation5 + $0x38] sm:$0xff]
    %v89 = vld [vmem:[#allocation5 + $0x40] sm:$0xff]
    %v90 = vld [vmem:[#allocation5 + $0x48] sm:$0xff]
    %v91 = vld [vmem:[#allocation5 + $0x50] sm:$0xff]
    %v92 = vld [vmem:[#allocation5 + $0x58] sm:$0xff]
    %v93 = vld [vmem:[#allocation5 + $0x60] sm:$0xff]
    %v94 = vld [vmem:[#allocation5 + $0x68] sm:$0xff]
    %v95 = vld [vmem:[#allocation5 + $0x70] sm:$0xff]
    %v96 = vld [vmem:[#allocation5 + $0x78] sm:$0xff]
    %v97 = vld [vmem:[#allocation5 + $0x80] sm:$0xff]
    %v98 = vld [vmem:[#allocation5 + $0x88] sm:$0xff]
    %v99 = vld [vmem:[#allocation5 + $0x90] sm:$0xff]
    %v100 = vld [vmem:[#allocation5 + $0x98] sm:$0xff]
    %v101 = vld [vmem:[#allocation5 + $0xa0] sm:$0xff]
    %v102 = vld [vmem:[#allocation5 + $0xa8] sm:$0xff]
    %v103 = vld [vmem:[#allocation5 + $0xb0] sm:$0xff]
    %v104 = vld [vmem:[#allocation5 + $0xb8] sm:$0xff]
    %v105 = vld [vmem:[#allocation5 + $0xc0] sm:$0xff]
    %v106 = vld [vmem:[#allocation5 + $0xc8] sm:$0xff]
    %v107 = vld [vmem:[#allocation5 + $0xd0] sm:$0xff]
    %v108 = vld [vmem:[#allocation5 + $0xd8] sm:$0xff]
    %v109 = vld [vmem:[#allocation5 + $0xe0] sm:$0xff]
    %v110 = vld [vmem:[#allocation5 + $0xe8] sm:$0xff]
    %v111 = vld [vmem:[#allocation5 + $0xf0] sm:$0xff]
    %v112 = vld [vmem:[#allocation5 + $0xf8] sm:$0xff]
    %v113 = vld [vmem:[#allocation5 + $0x100] sm:$0xff]
    %v114 = vld [vmem:[#allocation5 + $0x108] sm:$0xff]
    %v115 = vld [vmem:[#allocation5 + $0x110] sm:$0xff]
    %v116 = vld [vmem:[#allocation5 + $0x118] sm:$0xff]
    %v117 = vld [vmem:[#allocation5 + $0x120] sm:$0xff]
    %v118 = vld [vmem:[#allocation5 + $0x128] sm:$0xff]
    %v119 = vld [vmem:[#allocation5 + $0x130] sm:$0xff]
    %v120 = vld [vmem:[#allocation5 + $0x138] sm:$0xff]
    %v121 = vld [vmem:[#allocation5 + $0x140] sm:$0xff]
    %v122 = vld [vmem:[#allocation5 + $0x148] sm:$0xff]
    %v123 = vld [vmem:[#allocation5 + $0x150] sm:$0xff]
    %v124 = vld [vmem:[#allocation5 + $0x158] sm:$0xff]
    %v125 = vld [vmem:[#allocation5 + $0x160] sm:$0xff]
    %v126 = vld [vmem:[#allocation5 + $0x168] sm:$0xff]
    %v127 = vld [vmem:[#allocation5 + $0x170] sm:$0xff]
    %v128 = vld [vmem:[#allocation5 + $0x178] sm:$0xff]
    %v129 = vld [vmem:[#allocation5 + $0x180] sm:$0xff]
    %v130 = vld [vmem:[#allocation5 + $0x188] sm:$0xff]
    %v131 = vld [vmem:[#allocation5 + $0x190] sm:$0xff]
    %v132 = vld [vmem:[#allocation5 + $0x198] sm:$0xff]
    %v133 = vld [vmem:[#allocation5 + $0x1a0] sm:$0xff]
    %v134 = vld [vmem:[#allocation5 + $0x1a8] sm:$0xff]
    %v135 = vld [vmem:[#allocation5 + $0x1b0] sm:$0xff]
    %v136 = vld [vmem:[#allocation5 + $0x1b8] sm:$0xff]
    %v137 = vld [vmem:[#allocation5 + $0x1c0] sm:$0xff]
    %v138 = vld [vmem:[#allocation5 + $0x1c8] sm:$0xff]
    %v139 = vld [vmem:[#allocation5 + $0x1d0] sm:$0xff]
    %v140 = vld [vmem:[#allocation5 + $0x1d8] sm:$0xff]
    %v141 = vld [vmem:[#allocation5 + $0x1e0] sm:$0xff]
    %v142 = vld [vmem:[#allocation5 + $0x1e8] sm:$0xff]
    %v143 = vld [vmem:[#allocation5 + $0x1f0] sm:$0xff]
    %v144 = vld [vmem:[#allocation5 + $0x1f8] sm:$0xff]
    %v145 = vld [vmem:[#allocation5 + $0x200] sm:$0xff]
    %v146 = vld [vmem:[#allocation5 + $0x208] sm:$0xff]
    %v147 = vld [vmem:[#allocation5 + $0x210] sm:$0xff]
    %v148 = vld [vmem:[#allocation5 + $0x218] sm:$0xff]
    %v149 = vld [vmem:[#allocation5 + $0x220] sm:$0xff]
    %v150 = vld [vmem:[#allocation5 + $0x228] sm:$0xff]
    %v151 = vld [vmem:[#allocation5 + $0x230] sm:$0xff]
    %v152 = vld [vmem:[#allocation5 + $0x238] sm:$0xff]
    %v153 = vld [vmem:[#allocation5 + $0x240] sm:$0xff]
    %v154 = vld [vmem:[#allocation5 + $0x248] sm:$0xff]
    %v155 = vld [vmem:[#allocation5 + $0x250] sm:$0xff]
    %v156 = vld [vmem:[#allocation5 + $0x258] sm:$0xff]
    %v157 = vld [vmem:[#allocation5 + $0x260] sm:$0xff]
    %v158 = vld [vmem:[#allocation5 + $0x268] sm:$0xff]
    %v159 = vld [vmem:[#allocation5 + $0x270] sm:$0xff]
    %v160 = vld [vmem:[#allocation5 + $0x278] sm:$0xff]
    %v161 = vld [vmem:[#allocation5 + $0x280] sm:$0xff]
    %v162 = vld [vmem:[#allocation5 + $0x288] sm:$0xff]
    %v163 = vld [vmem:[#allocation5 + $0x290] sm:$0xff]
    %v164 = vld [vmem:[#allocation5 + $0x298] sm:$0xff]
    %v165 = vld [vmem:[#allocation5 + $0x2a0] sm:$0xff]
    %v166 = vld [vmem:[#allocation5 + $0x2a8] sm:$0xff]
    %v167 = vld [vmem:[#allocation5 + $0x2b0] sm:$0xff]
    %v168 = vld [vmem:[#allocation5 + $0x2b8] sm:$0xff]
    %v169 = vld [vmem:[#allocation5 + $0x2c0] sm:$0xff]
    %v170 = vld [vmem:[#allocation5 + $0x2c8] sm:$0xff]
    %v171 = vld [vmem:[#allocation5 + $0x2d0] sm:$0xff]
    %v172 = vld [vmem:[#allocation5 + $0x2d8] sm:$0xff]
    %v173 = vld [vmem:[#allocation5 + $0x2e0] sm:$0xff]
    %v174 = vld [vmem:[#allocation5 + $0x2e8] sm:$0xff]
    %v175 = vld [vmem:[#allocation5 + $0x2f0] sm:$0xff]
    %v176 = vld [vmem:[#allocation5 + $0x2f8] sm:$0xff]
    %v177 = vld [vmem:[#allocation5 + $0x300] sm:$0xff]
    %v178 = vld [vmem:[#allocation5 + $0x308] sm:$0xff]
    %v179 = vld [vmem:[#allocation5 + $0x310] sm:$0xff]
    %v180 = vld [vmem:[#allocation5 + $0x318] sm:$0xff]
    %v181 = vld [vmem:[#allocation5 + $0x320] sm:$0xff]
    %v182 = vld [vmem:[#allocation5 + $0x328] sm:$0xff]
    %v183 = vld [vmem:[#allocation5 + $0x330] sm:$0xff]
    %v184 = vld [vmem:[#allocation5 + $0x338] sm:$0xff]
    %v185 = vld [vmem:[#allocation5 + $0x340] sm:$0xff]
    %v186 = vld [vmem:[#allocation5 + $0x348] sm:$0xff]
    %v187 = vld [vmem:[#allocation5 + $0x350] sm:$0xff]
    %v188 = vld [vmem:[#allocation5 + $0x358] sm:$0xff]
    %v189 = vld [vmem:[#allocation5 + $0x360] sm:$0xff]
    %v190 = vld [vmem:[#allocation5 + $0x368] sm:$0xff]
    %v191 = vld [vmem:[#allocation5 + $0x370] sm:$0xff]
    %v192 = vld [vmem:[#allocation5 + $0x378] sm:$0xff]
    %v193 = vld [vmem:[#allocation5 + $0x380] sm:$0xff]
    %v194 = vld [vmem:[#allocation5 + $0x388] sm:$0xff]
    %v195 = vld [vmem:[#allocation5 + $0x390] sm:$0xff]
    %v196 = vld [vmem:[#allocation5 + $0x398] sm:$0xff]
    %v197 = vld [vmem:[#allocation5 + $0x3a0] sm:$0xff]
    %v198 = vld [vmem:[#allocation5 + $0x3a8] sm:$0xff]
    %v199 = vld [vmem:[#allocation5 + $0x3b0] sm:$0xff]
    %v200 = vld [vmem:[#allocation5 + $0x3b8] sm:$0xff]
    %v201 = vld [vmem:[#allocation5 + $0x3c0] sm:$0xff]
    %v202 = vld [vmem:[#allocation5 + $0x3c8] sm:$0xff]
    %v203 = vld [vmem:[#allocation5 + $0x3d0] sm:$0xff]
    %v204 = vld [vmem:[#allocation5 + $0x3d8] sm:$0xff]
    %v205 = vld [vmem:[#allocation5 + $0x3e0] sm:$0xff]
    %v206 = vld [vmem:[#allocation5 + $0x3e8] sm:$0xff]
    %v207 = vld [vmem:[#allocation5 + $0x3f0] sm:$0xff]
    %v208 = vld [vmem:[#allocation5 + $0x3f8] sm:$0xff]
    %v209 = vld [vmem:[%s2] sm:$0xf]
    %v211 = vlaneseq
    %v212 = vshrl.u32 %v211, 7
    %v213 = vsub.s32 0, %v212
    %v214 = vrot.slane %v80, %v213
    %v215 = vlaneseq
    %v216 = vshrl.u32 %v215, 7
    %v217 = vsub.s32 1, %v216
    %v218 = vrot.slane %v80, %v217
    %v222 = vlaneseq
    %v223 = vshrl.u32 %v222, 7
    %v224 = vsub.s32 0, %v223
    %v225 = vrot.slane %v209, %v224
    %v226 = vlaneseq
    %v227 = vshrl.u32 %v226, 7
    %v228 = vsub.s32 1, %v227
    %v229 = vrot.slane %v209, %v228
    %v230 = vlaneseq
    %v231 = vshrl.u32 %v230, 7
    %v232 = vsub.s32 2, %v231
    %v233 = vrot.slane %v209, %v232
    %v234 = vlaneseq
    %v235 = vshrl.u32 %v234, 7
    %v236 = vsub.s32 3, %v235
    %v237 = vrot.slane %v209, %v236
    %242 = vmatprep.subr.mxu0 %v82
    %243 = vmatpush1.msra.mxu0 %v81
    %244 = vmatprep.subr.mxu0 %v86
    %245 = vmatpush1.msra.mxu0 %v85
    %246 = vmatprep.subr.mxu0 %v90
    %247 = vmatpush1.msra.mxu0 %v89
    %248 = vmatprep.subr.mxu0 %v94
    %249 = vmatpush1.msra.mxu0 %v93
    %250 = vmatprep.subr.mxu0 %v98
    %251 = vmatpush1.msra.mxu0 %v97
    %252 = vmatprep.subr.mxu0 %v102
    %253 = vmatpush1.msra.mxu0 %v101
    %254 = vmatprep.subr.mxu0 %v106
    %255 = vmatpush1.msra.mxu0 %v105
    %256 = vmatprep.subr.mxu0 %v110
    %257 = vmatpush1.msra.mxu0 %v109
    %258 = vmatprep.subr.mxu0 %v114
    %259 = vmatpush1.msra.mxu0 %v113
    %260 = vmatprep.subr.mxu0 %v118
    %261 = vmatpush1.msra.mxu0 %v117
    %262 = vmatprep.subr.mxu0 %v122
    %263 = vmatpush1.msra.mxu0 %v121
    %264 = vmatprep.subr.mxu0 %v126
    %265 = vmatpush1.msra.mxu0 %v125
    %266 = vmatprep.subr.mxu0 %v130
    %267 = vmatpush1.msra.mxu0 %v129
    %268 = vmatprep.subr.mxu0 %v134
    %269 = vmatpush1.msra.mxu0 %v133
    %270 = vmatprep.subr.mxu0 %v138
    %271 = vmatpush1.msra.mxu0 %v137
    %272 = vmatprep.subr.mxu0 %v142
    %273 = vmatpush1.msra.mxu0 %v141
    %274 = vmatprep.subr.mxu0 %v146
    %275 = vmatpush1.msra.mxu0 %v145
    %276 = vmatprep.subr.mxu0 %v150
    %277 = vmatpush1.msra.mxu0 %v149
    %278 = vmatprep.subr.mxu0 %v154
    %279 = vmatpush1.msra.mxu0 %v153
    %280 = vmatprep.subr.mxu0 %v158
    %281 = vmatpush1.msra.mxu0 %v157
    %282 = vmatprep.subr.mxu0 %v162
    %283 = vmatpush1.msra.mxu0 %v161
    %284 = vmatprep.subr.mxu0 %v166
    %285 = vmatpush1.msra.mxu0 %v165
    %286 = vmatprep.subr.mxu0 %v170
    %287 = vmatpush1.msra.mxu0 %v169
    %288 = vmatprep.subr.mxu0 %v174
    %289 = vmatpush1.msra.mxu0 %v173
    %290 = vmatprep.subr.mxu0 %v178
    %291 = vmatpush1.msra.mxu0 %v177
    %292 = vmatprep.subr.mxu0 %v182
    %293 = vmatpush1.msra.mxu0 %v181
    %294 = vmatprep.subr.mxu0 %v186
    %295 = vmatpush1.msra.mxu0 %v185
    %296 = vmatprep.subr.mxu0 %v190
    %297 = vmatpush1.msra.mxu0 %v189
    %298 = vmatprep.subr.mxu0 %v194
    %299 = vmatpush1.msra.mxu0 %v193
    %300 = vmatprep.subr.mxu0 %v198
    %301 = vmatpush1.msra.mxu0 %v197
    %302 = vmatprep.subr.mxu0 %v202
    %303 = vmatpush1.msra.mxu0 %v201
    %304 = vmatprep.subr.mxu0 %v206
    %305 = vmatpush1.msra.mxu0 %v205
    %306 = vmatprep.mubr.f32.mxu0 %v218
    %307 = vmatmul.mubr.f32.gmra.mrb[0].mxu0 %v214
    %v308 = vpop.f32.mrb[0].mxu0
    %v309 = vadd.f32 %v225, %v308
    %v310 = vpop.f32.mrb[0].mxu0
    %v311 = vadd.f32 %v229, %v310
    %312 = vdwg.mxu0
    %313 = vmatprep.subr.mxu0 %v84
    %314 = vmatpush1.msra.mxu0 %v83
    %315 = vmatprep.subr.mxu0 %v88
    %316 = vmatpush1.msra.mxu0 %v87
    %317 = vmatprep.subr.mxu0 %v92
    %318 = vmatpush1.msra.mxu0 %v91
    %319 = vmatprep.subr.mxu0 %v96
    %320 = vmatpush1.msra.mxu0 %v95
    %321 = vmatprep.subr.mxu0 %v100
    %322 = vmatpush1.msra.mxu0 %v99
    %323 = vmatprep.subr.mxu0 %v104
    %324 = vmatpush1.msra.mxu0 %v103
    %325 = vmatprep.subr.mxu0 %v108
    %326 = vmatpush1.msra.mxu0 %v107
    %327 = vmatprep.subr.mxu0 %v112
    %328 = vmatpush1.msra.mxu0 %v111
    %329 = vmatprep.subr.mxu0 %v116
    %330 = vmatpush1.msra.mxu0 %v115
    %331 = vmatprep.subr.mxu0 %v120
    %332 = vmatpush1.msra.mxu0 %v119
    %333 = vmatprep.subr.mxu0 %v124
    %334 = vmatpush1.msra.mxu0 %v123
    %335 = vmatprep.subr.mxu0 %v128
    %336 = vmatpush1.msra.mxu0 %v127
    %337 = vmatprep.subr.mxu0 %v132
    %338 = vmatpush1.msra.mxu0 %v131
    %339 = vmatprep.subr.mxu0 %v136
    %340 = vmatpush1.msra.mxu0 %v135
    %341 = vmatprep.subr.mxu0 %v140
    %342 = vmatpush1.msra.mxu0 %v139
    %343 = vmatprep.subr.mxu0 %v144
    %344 = vmatpush1.msra.mxu0 %v143
    %345 = vmatprep.subr.mxu0 %v148
    %346 = vmatpush1.msra.mxu0 %v147
    %347 = vmatprep.subr.mxu0 %v152
    %348 = vmatpush1.msra.mxu0 %v151
    %349 = vmatprep.subr.mxu0 %v156
    %350 = vmatpush1.msra.mxu0 %v155
    %351 = vmatprep.subr.mxu0 %v160
    %352 = vmatpush1.msra.mxu0 %v159
    %353 = vmatprep.subr.mxu0 %v164
    %354 = vmatpush1.msra.mxu0 %v163
    %355 = vmatprep.subr.mxu0 %v168
    %356 = vmatpush1.msra.mxu0 %v167
    %357 = vmatprep.subr.mxu0 %v172
    %358 = vmatpush1.msra.mxu0 %v171
    %359 = vmatprep.subr.mxu0 %v176
    %360 = vmatpush1.msra.mxu0 %v175
    %361 = vmatprep.subr.mxu0 %v180
    %362 = vmatpush1.msra.mxu0 %v179
    %363 = vmatprep.subr.mxu0 %v184
    %364 = vmatpush1.msra.mxu0 %v183
    %365 = vmatprep.subr.mxu0 %v188
    %366 = vmatpush1.msra.mxu0 %v187
    %367 = vmatprep.subr.mxu0 %v192
    %368 = vmatpush1.msra.mxu0 %v191
    %369 = vmatprep.subr.mxu0 %v196
    %370 = vmatpush1.msra.mxu0 %v195
    %371 = vmatprep.subr.mxu0 %v200
    %372 = vmatpush1.msra.mxu0 %v199
    %373 = vmatprep.subr.mxu0 %v204
    %374 = vmatpush1.msra.mxu0 %v203
    %375 = vmatprep.subr.mxu0 %v208
    %376 = vmatpush1.msra.mxu0 %v207
    %377 = vmatprep.mubr.f32.mxu0 %v218
    %378 = vmatmul.mubr.f32.gmra.mrb[0].mxu0 %v214
    %v379 = vpop.f32.mrb[0].mxu0
    %v380 = vadd.f32 %v233, %v379
    %v381 = vpop.f32.mrb[0].mxu0
    %v382 = vadd.f32 %v237, %v381
    %383 = vdwg.mxu0
    %v384 = vmin.f32 %v309, 20.0
    %v385 = vmin.f32 %v311, 20.0
    %v386 = vmin.f32 %v380, 20.0
    %v387 = vmin.f32 %v382, 20.0
    %v388 = vmul.f32 %v384, 1.442695
    %v389 = vpow.pop %v388
    %v390 = vmul.f32 %v385, 1.442695
    %v391 = vpow.pop %v390
    %v392 = vmul.f32 %v386, 1.442695
    %v393 = vpow.pop %v392
    %v394 = vmul.f32 %v387, 1.442695
    %v395 = vpow.pop %v394
    %v396 = vadd.f32 %v389, 1.0
    %v397 = vadd.f32 %v391, 1.0
    %v398 = vadd.f32 %v393, 1.0
    %v399 = vadd.f32 %v395, 1.0
    %v400 = vmul.f32 %v396, %v396
    %v401 = vmul.f32 %v397, %v397
    %v402 = vmul.f32 %v398, %v398
    %v403 = vmul.f32 %v399, %v399
    %v404 = vadd.f32 %v400, 1.0
    %v405 = vadd.f32 %v401, 1.0
    %v406 = vadd.f32 %v402, 1.0
    %v407 = vadd.f32 %v403, 1.0
    %v408 = vrcp.pop %v404
    %v409 = vrcp.pop %v405
    %v410 = vrcp.pop %v406
    %v411 = vrcp.pop %v407
    %v412 = vmul.f32 %v404, %v408
    %v413 = vmul.f32 %v405, %v409
    %v414 = vmul.f32 %v406, %v410
    %v415 = vmul.f32 %v407, %v411
    %v416 = vsub.f32 2.0, %v412
    %v417 = vsub.f32 2.0, %v413
    %v418 = vsub.f32 2.0, %v414
    %v419 = vsub.f32 2.0, %v415
    %v420 = vmul.f32 %v408, %v416
    %v421 = vmul.f32 %v409, %v417
    %v422 = vmul.f32 %v410, %v418
    %v423 = vmul.f32 %v411, %v419
    %v424 = vsub.f32 %v400, 1.0
    %v425 = vsub.f32 %v401, 1.0
    %v426 = vsub.f32 %v402, 1.0
    %v427 = vsub.f32 %v403, 1.0
    %v428 = vmul.f32 %v424, %v420
    %v429 = vmul.f32 %v425, %v421
    %v430 = vmul.f32 %v426, %v422
    %v431 = vmul.f32 %v427, %v423
    %vm432 = vcmp.gt.f32.partialorder %v309, 20.0
    %vm433 = vcmp.gt.f32.partialorder %v311, 20.0
    %vm434 = vcmp.gt.f32.partialorder %v380, 20.0
    %vm435 = vcmp.gt.f32.partialorder %v382, 20.0
    %v436 = vmul.f32 %v309, %v428
    %v437 = vmul.f32 %v311, %v429
    %v438 = vmul.f32 %v380, %v430
    %v439 = vmul.f32 %v382, %v431
    %v440 = vsel %vm432, %v309, %v436
    %v441 = vsel %vm433, %v311, %v437
    %v442 = vsel %vm434, %v380, %v438
    %v443 = vsel %vm435, %v382, %v439
    %v444 = vld [vmem:[#allocation7] sm:$0xff]
    %v445 = vld [vmem:[#allocation7 + $0x8] sm:$0xff]
    %v446 = vld [vmem:[#allocation7 + $0x10] sm:$0xff]
    %v447 = vld [vmem:[#allocation7 + $0x18] sm:$0xff]
    %v448 = vld [vmem:[#allocation7 + $0x20] sm:$0xff]
    %v449 = vld [vmem:[#allocation7 + $0x28] sm:$0xff]
    %v450 = vld [vmem:[#allocation7 + $0x30] sm:$0xff]
    %v451 = vld [vmem:[#allocation7 + $0x38] sm:$0xff]
    %v452 = vld [vmem:[#allocation7 + $0x40] sm:$0xff]
    %v453 = vld [vmem:[#allocation7 + $0x48] sm:$0xff]
    %v454 = vld [vmem:[#allocation7 + $0x50] sm:$0xff]
    %v455 = vld [vmem:[#allocation7 + $0x58] sm:$0xff]
    %v456 = vld [vmem:[#allocation7 + $0x60] sm:$0xff]
    %v457 = vld [vmem:[#allocation7 + $0x68] sm:$0xff]
    %v458 = vld [vmem:[#allocation7 + $0x70] sm:$0xff]
    %v459 = vld [vmem:[#allocation7 + $0x78] sm:$0xff]
    %v460 = vld [vmem:[#allocation7 + $0x80] sm:$0xff]
    %v461 = vld [vmem:[#allocation7 + $0x88] sm:$0xff]
    %v462 = vld [vmem:[#allocation7 + $0x90] sm:$0xff]
    %v463 = vld [vmem:[#allocation7 + $0x98] sm:$0xff]
    %v464 = vld [vmem:[#allocation7 + $0xa0] sm:$0xff]
    %v465 = vld [vmem:[#allocation7 + $0xa8] sm:$0xff]
    %v466 = vld [vmem:[#allocation7 + $0xb0] sm:$0xff]
    %v467 = vld [vmem:[#allocation7 + $0xb8] sm:$0xff]
    %v468 = vld [vmem:[#allocation7 + $0xc0] sm:$0xff]
    %v469 = vld [vmem:[#allocation7 + $0xc8] sm:$0xff]
    %v470 = vld [vmem:[#allocation7 + $0xd0] sm:$0xff]
    %v471 = vld [vmem:[#allocation7 + $0xd8] sm:$0xff]
    %v472 = vld [vmem:[#allocation7 + $0xe0] sm:$0xff]
    %v473 = vld [vmem:[#allocation7 + $0xe8] sm:$0xff]
    %v474 = vld [vmem:[#allocation7 + $0xf0] sm:$0xff]
    %v475 = vld [vmem:[#allocation7 + $0xf8] sm:$0xff]
    %v476 = vld [vmem:[#allocation7 + $0x100] sm:$0xff]
    %v477 = vld [vmem:[#allocation7 + $0x108] sm:$0xff]
    %v478 = vld [vmem:[#allocation7 + $0x110] sm:$0xff]
    %v479 = vld [vmem:[#allocation7 + $0x118] sm:$0xff]
    %v480 = vld [vmem:[#allocation7 + $0x120] sm:$0xff]
    %v481 = vld [vmem:[#allocation7 + $0x128] sm:$0xff]
    %v482 = vld [vmem:[#allocation7 + $0x130] sm:$0xff]
    %v483 = vld [vmem:[#allocation7 + $0x138] sm:$0xff]
    %v484 = vld [vmem:[#allocation7 + $0x140] sm:$0xff]
    %v485 = vld [vmem:[#allocation7 + $0x148] sm:$0xff]
    %v486 = vld [vmem:[#allocation7 + $0x150] sm:$0xff]
    %v487 = vld [vmem:[#allocation7 + $0x158] sm:$0xff]
    %v488 = vld [vmem:[#allocation7 + $0x160] sm:$0xff]
    %v489 = vld [vmem:[#allocation7 + $0x168] sm:$0xff]
    %v490 = vld [vmem:[#allocation7 + $0x170] sm:$0xff]
    %v491 = vld [vmem:[#allocation7 + $0x178] sm:$0xff]
    %v492 = vld [vmem:[#allocation7 + $0x180] sm:$0xff]
    %v493 = vld [vmem:[#allocation7 + $0x188] sm:$0xff]
    %v494 = vld [vmem:[#allocation7 + $0x190] sm:$0xff]
    %v495 = vld [vmem:[#allocation7 + $0x198] sm:$0xff]
    %v496 = vld [vmem:[#allocation7 + $0x1a0] sm:$0xff]
    %v497 = vld [vmem:[#allocation7 + $0x1a8] sm:$0xff]
    %v498 = vld [vmem:[#allocation7 + $0x1b0] sm:$0xff]
    %v499 = vld [vmem:[#allocation7 + $0x1b8] sm:$0xff]
    %v500 = vld [vmem:[#allocation7 + $0x1c0] sm:$0xff]
    %v501 = vld [vmem:[#allocation7 + $0x1c8] sm:$0xff]
    %v502 = vld [vmem:[#allocation7 + $0x1d0] sm:$0xff]
    %v503 = vld [vmem:[#allocation7 + $0x1d8] sm:$0xff]
    %v504 = vld [vmem:[#allocation7 + $0x1e0] sm:$0xff]
    %v505 = vld [vmem:[#allocation7 + $0x1e8] sm:$0xff]
    %v506 = vld [vmem:[#allocation7 + $0x1f0] sm:$0xff]
    %v507 = vld [vmem:[#allocation7 + $0x1f8] sm:$0xff]
    %v508 = vld [vmem:[#allocation7 + $0x200] sm:$0xff]
    %v509 = vld [vmem:[#allocation7 + $0x208] sm:$0xff]
    %v510 = vld [vmem:[#allocation7 + $0x210] sm:$0xff]
    %v511 = vld [vmem:[#allocation7 + $0x218] sm:$0xff]
    %v512 = vld [vmem:[#allocation7 + $0x220] sm:$0xff]
    %v513 = vld [vmem:[#allocation7 + $0x228] sm:$0xff]
    %v514 = vld [vmem:[#allocation7 + $0x230] sm:$0xff]
    %v515 = vld [vmem:[#allocation7 + $0x238] sm:$0xff]
    %v516 = vld [vmem:[#allocation7 + $0x240] sm:$0xff]
    %v517 = vld [vmem:[#allocation7 + $0x248] sm:$0xff]
    %v518 = vld [vmem:[#allocation7 + $0x250] sm:$0xff]
    %v519 = vld [vmem:[#allocation7 + $0x258] sm:$0xff]
    %v520 = vld [vmem:[#allocation7 + $0x260] sm:$0xff]
    %v521 = vld [vmem:[#allocation7 + $0x268] sm:$0xff]
    %v522 = vld [vmem:[#allocation7 + $0x270] sm:$0xff]
    %v523 = vld [vmem:[#allocation7 + $0x278] sm:$0xff]
    %v524 = vld [vmem:[#allocation7 + $0x280] sm:$0xff]
    %v525 = vld [vmem:[#allocation7 + $0x288] sm:$0xff]
    %v526 = vld [vmem:[#allocation7 + $0x290] sm:$0xff]
    %v527 = vld [vmem:[#allocation7 + $0x298] sm:$0xff]
    %v528 = vld [vmem:[#allocation7 + $0x2a0] sm:$0xff]
    %v529 = vld [vmem:[#allocation7 + $0x2a8] sm:$0xff]
    %v530 = vld [vmem:[#allocation7 + $0x2b0] sm:$0xff]
    %v531 = vld [vmem:[#allocation7 + $0x2b8] sm:$0xff]
    %v532 = vld [vmem:[#allocation7 + $0x2c0] sm:$0xff]
    %v533 = vld [vmem:[#allocation7 + $0x2c8] sm:$0xff]
    %v534 = vld [vmem:[#allocation7 + $0x2d0] sm:$0xff]
    %v535 = vld [vmem:[#allocation7 + $0x2d8] sm:$0xff]
    %v536 = vld [vmem:[#allocation7 + $0x2e0] sm:$0xff]
    %v537 = vld [vmem:[#allocation7 + $0x2e8] sm:$0xff]
    %v538 = vld [vmem:[#allocation7 + $0x2f0] sm:$0xff]
    %v539 = vld [vmem:[#allocation7 + $0x2f8] sm:$0xff]
    %v540 = vld [vmem:[#allocation7 + $0x300] sm:$0xff]
    %v541 = vld [vmem:[#allocation7 + $0x308] sm:$0xff]
    %v542 = vld [vmem:[#allocation7 + $0x310] sm:$0xff]
    %v543 = vld [vmem:[#allocation7 + $0x318] sm:$0xff]
    %v544 = vld [vmem:[#allocation7 + $0x320] sm:$0xff]
    %v545 = vld [vmem:[#allocation7 + $0x328] sm:$0xff]
    %v546 = vld [vmem:[#allocation7 + $0x330] sm:$0xff]
    %v547 = vld [vmem:[#allocation7 + $0x338] sm:$0xff]
    %v548 = vld [vmem:[#allocation7 + $0x340] sm:$0xff]
    %v549 = vld [vmem:[#allocation7 + $0x348] sm:$0xff]
    %v550 = vld [vmem:[#allocation7 + $0x350] sm:$0xff]
    %v551 = vld [vmem:[#allocation7 + $0x358] sm:$0xff]
    %v552 = vld [vmem:[#allocation7 + $0x360] sm:$0xff]
    %v553 = vld [vmem:[#allocation7 + $0x368] sm:$0xff]
    %v554 = vld [vmem:[#allocation7 + $0x370] sm:$0xff]
    %v555 = vld [vmem:[#allocation7 + $0x378] sm:$0xff]
    %v556 = vld [vmem:[#allocation7 + $0x380] sm:$0xff]
    %v557 = vld [vmem:[#allocation7 + $0x388] sm:$0xff]
    %v558 = vld [vmem:[#allocation7 + $0x390] sm:$0xff]
    %v559 = vld [vmem:[#allocation7 + $0x398] sm:$0xff]
    %v560 = vld [vmem:[#allocation7 + $0x3a0] sm:$0xff]
    %v561 = vld [vmem:[#allocation7 + $0x3a8] sm:$0xff]
    %v562 = vld [vmem:[#allocation7 + $0x3b0] sm:$0xff]
    %v563 = vld [vmem:[#allocation7 + $0x3b8] sm:$0xff]
    %v564 = vld [vmem:[#allocation7 + $0x3c0] sm:$0xff]
    %v565 = vld [vmem:[#allocation7 + $0x3c8] sm:$0xff]
    %v566 = vld [vmem:[#allocation7 + $0x3d0] sm:$0xff]
    %v567 = vld [vmem:[#allocation7 + $0x3d8] sm:$0xff]
    %v568 = vld [vmem:[#allocation7 + $0x3e0] sm:$0xff]
    %v569 = vld [vmem:[#allocation7 + $0x3e8] sm:$0xff]
    %v570 = vld [vmem:[#allocation7 + $0x3f0] sm:$0xff]
    %v571 = vld [vmem:[#allocation7 + $0x3f8] sm:$0xff]
    %v572 = vld [vmem:[#allocation7 + $0x400] sm:$0xff]
    %v573 = vld [vmem:[#allocation7 + $0x408] sm:$0xff]
    %v574 = vld [vmem:[#allocation7 + $0x410] sm:$0xff]
    %v575 = vld [vmem:[#allocation7 + $0x418] sm:$0xff]
    %v576 = vld [vmem:[#allocation7 + $0x420] sm:$0xff]
    %v577 = vld [vmem:[#allocation7 + $0x428] sm:$0xff]
    %v578 = vld [vmem:[#allocation7 + $0x430] sm:$0xff]
    %v579 = vld [vmem:[#allocation7 + $0x438] sm:$0xff]
    %v580 = vld [vmem:[#allocation7 + $0x440] sm:$0xff]
    %v581 = vld [vmem:[#allocation7 + $0x448] sm:$0xff]
    %v582 = vld [vmem:[#allocation7 + $0x450] sm:$0xff]
    %v583 = vld [vmem:[#allocation7 + $0x458] sm:$0xff]
    %v584 = vld [vmem:[#allocation7 + $0x460] sm:$0xff]
    %v585 = vld [vmem:[#allocation7 + $0x468] sm:$0xff]
    %v586 = vld [vmem:[#allocation7 + $0x470] sm:$0xff]
    %v587 = vld [vmem:[#allocation7 + $0x478] sm:$0xff]
    %v588 = vld [vmem:[#allocation7 + $0x480] sm:$0xff]
    %v589 = vld [vmem:[#allocation7 + $0x488] sm:$0xff]
    %v590 = vld [vmem:[#allocation7 + $0x490] sm:$0xff]
    %v591 = vld [vmem:[#allocation7 + $0x498] sm:$0xff]
    %v592 = vld [vmem:[#allocation7 + $0x4a0] sm:$0xff]
    %v593 = vld [vmem:[#allocation7 + $0x4a8] sm:$0xff]
    %v594 = vld [vmem:[#allocation7 + $0x4b0] sm:$0xff]
    %v595 = vld [vmem:[#allocation7 + $0x4b8] sm:$0xff]
    %v596 = vld [vmem:[#allocation7 + $0x4c0] sm:$0xff]
    %v597 = vld [vmem:[#allocation7 + $0x4c8] sm:$0xff]
    %v598 = vld [vmem:[#allocation7 + $0x4d0] sm:$0xff]
    %v599 = vld [vmem:[#allocation7 + $0x4d8] sm:$0xff]
    %v600 = vld [vmem:[#allocation7 + $0x4e0] sm:$0xff]
    %v601 = vld [vmem:[#allocation7 + $0x4e8] sm:$0xff]
    %v602 = vld [vmem:[#allocation7 + $0x4f0] sm:$0xff]
    %v603 = vld [vmem:[#allocation7 + $0x4f8] sm:$0xff]
    %v604 = vld [vmem:[#allocation7 + $0x500] sm:$0xff]
    %v605 = vld [vmem:[#allocation7 + $0x508] sm:$0xff]
    %v606 = vld [vmem:[#allocation7 + $0x510] sm:$0xff]
    %v607 = vld [vmem:[#allocation7 + $0x518] sm:$0xff]
    %v608 = vld [vmem:[#allocation7 + $0x520] sm:$0xff]
    %v609 = vld [vmem:[#allocation7 + $0x528] sm:$0xff]
    %v610 = vld [vmem:[#allocation7 + $0x530] sm:$0xff]
    %v611 = vld [vmem:[#allocation7 + $0x538] sm:$0xff]
    %v612 = vld [vmem:[#allocation7 + $0x540] sm:$0xff]
    %v613 = vld [vmem:[#allocation7 + $0x548] sm:$0xff]
    %v614 = vld [vmem:[#allocation7 + $0x550] sm:$0xff]
    %v615 = vld [vmem:[#allocation7 + $0x558] sm:$0xff]
    %v616 = vld [vmem:[#allocation7 + $0x560] sm:$0xff]
    %v617 = vld [vmem:[#allocation7 + $0x568] sm:$0xff]
    %v618 = vld [vmem:[#allocation7 + $0x570] sm:$0xff]
    %v619 = vld [vmem:[#allocation7 + $0x578] sm:$0xff]
    %v620 = vld [vmem:[#allocation7 + $0x580] sm:$0xff]
    %v621 = vld [vmem:[#allocation7 + $0x588] sm:$0xff]
    %v622 = vld [vmem:[#allocation7 + $0x590] sm:$0xff]
    %v623 = vld [vmem:[#allocation7 + $0x598] sm:$0xff]
    %v624 = vld [vmem:[#allocation7 + $0x5a0] sm:$0xff]
    %v625 = vld [vmem:[#allocation7 + $0x5a8] sm:$0xff]
    %v626 = vld [vmem:[#allocation7 + $0x5b0] sm:$0xff]
    %v627 = vld [vmem:[#allocation7 + $0x5b8] sm:$0xff]
    %v628 = vld [vmem:[#allocation7 + $0x5c0] sm:$0xff]
    %v629 = vld [vmem:[#allocation7 + $0x5c8] sm:$0xff]
    %v630 = vld [vmem:[#allocation7 + $0x5d0] sm:$0xff]
    %v631 = vld [vmem:[#allocation7 + $0x5d8] sm:$0xff]
    %v632 = vld [vmem:[#allocation7 + $0x5e0] sm:$0xff]
    %v633 = vld [vmem:[#allocation7 + $0x5e8] sm:$0xff]
    %v634 = vld [vmem:[#allocation7 + $0x5f0] sm:$0xff]
    %v635 = vld [vmem:[#allocation7 + $0x5f8] sm:$0xff]
    %v636 = vld [vmem:[%s4] sm:$0x7]
    %v638 = vlaneseq
    %v639 = vshrl.u32 %v638, 7
    %v640 = vsub.s32 0, %v639
    %v641 = vrot.slane %v636, %v640
    %v642 = vlaneseq
    %v643 = vshrl.u32 %v642, 7
    %v644 = vsub.s32 1, %v643
    %v645 = vrot.slane %v636, %v644
    %v646 = vlaneseq
    %v647 = vshrl.u32 %v646, 7
    %v648 = vsub.s32 2, %v647
    %v649 = vrot.slane %v636, %v648
    %653 = vmatprep.subr.mxu0 %v445
    %654 = vmatpush1.msra.mxu0 %v444
    %655 = vmatprep.subr.mxu0 %v448
    %656 = vmatpush1.msra.mxu0 %v447
    %657 = vmatprep.subr.mxu0 %v451
    %658 = vmatpush1.msra.mxu0 %v450
    %659 = vmatprep.subr.mxu0 %v454
    %660 = vmatpush1.msra.mxu0 %v453
    %661 = vmatprep.subr.mxu0 %v457
    %662 = vmatpush1.msra.mxu0 %v456
    %663 = vmatprep.subr.mxu0 %v460
    %664 = vmatpush1.msra.mxu0 %v459
    %665 = vmatprep.subr.mxu0 %v463
    %666 = vmatpush1.msra.mxu0 %v462
    %667 = vmatprep.subr.mxu0 %v466
    %668 = vmatpush1.msra.mxu0 %v465
    %669 = vmatprep.subr.mxu0 %v469
    %670 = vmatpush1.msra.mxu0 %v468
    %671 = vmatprep.subr.mxu0 %v472
    %672 = vmatpush1.msra.mxu0 %v471
    %673 = vmatprep.subr.mxu0 %v475
    %674 = vmatpush1.msra.mxu0 %v474
    %675 = vmatprep.subr.mxu0 %v478
    %676 = vmatpush1.msra.mxu0 %v477
    %677 = vmatprep.subr.mxu0 %v481
    %678 = vmatpush1.msra.mxu0 %v480
    %679 = vmatprep.subr.mxu0 %v484
    %680 = vmatpush1.msra.mxu0 %v483
    %681 = vmatprep.subr.mxu0 %v487
    %682 = vmatpush1.msra.mxu0 %v486
    %683 = vmatprep.subr.mxu0 %v490
    %684 = vmatpush1.msra.mxu0 %v489
    %685 = vmatprep.subr.mxu0 %v493
    %686 = vmatpush1.msra.mxu0 %v492
    %687 = vmatprep.subr.mxu0 %v496
    %688 = vmatpush1.msra.mxu0 %v495
    %689 = vmatprep.subr.mxu0 %v499
    %690 = vmatpush1.msra.mxu0 %v498
    %691 = vmatprep.subr.mxu0 %v502
    %692 = vmatpush1.msra.mxu0 %v501
    %693 = vmatprep.subr.mxu0 %v505
    %694 = vmatpush1.msra.mxu0 %v504
    %695 = vmatprep.subr.mxu0 %v508
    %696 = vmatpush1.msra.mxu0 %v507
    %697 = vmatprep.subr.mxu0 %v511
    %698 = vmatpush1.msra.mxu0 %v510
    %699 = vmatprep.subr.mxu0 %v514
    %700 = vmatpush1.msra.mxu0 %v513
    %701 = vmatprep.subr.mxu0 %v517
    %702 = vmatpush1.msra.mxu0 %v516
    %703 = vmatprep.subr.mxu0 %v520
    %704 = vmatpush1.msra.mxu0 %v519
    %705 = vmatprep.subr.mxu0 %v523
    %706 = vmatpush1.msra.mxu0 %v522
    %707 = vmatprep.subr.mxu0 %v526
    %708 = vmatpush1.msra.mxu0 %v525
    %709 = vmatprep.subr.mxu0 %v529
    %710 = vmatpush1.msra.mxu0 %v528
    %711 = vmatprep.subr.mxu0 %v532
    %712 = vmatpush1.msra.mxu0 %v531
    %713 = vmatprep.subr.mxu0 %v535
    %714 = vmatpush1.msra.mxu0 %v534
    %715 = vmatprep.subr.mxu0 %v538
    %716 = vmatpush1.msra.mxu0 %v537
    %717 = vmatprep.mubr.f32.mxu0 %v441
    %718 = vmatmul.mubr.f32.gmra.mrb[0].mxu0 %v440
    %v719 = vpop.f32.mrb[0].mxu0
    %v720 = vadd.f32 %v641, %v719
    %v721 = vpop.f32.mrb[0].mxu0
    %v722 = vadd.f32 %v645, %v721
    %723 = vdwg.mxu0
    %724 = vmatprep.subr.mxu0 %v541
    %725 = vmatpush1.msra.mxu0 %v540
    %726 = vmatprep.subr.mxu0 %v544
    %727 = vmatpush1.msra.mxu0 %v543
    %728 = vmatprep.subr.mxu0 %v547
    %729 = vmatpush1.msra.mxu0 %v546
    %730 = vmatprep.subr.mxu0 %v550
    %731 = vmatpush1.msra.mxu0 %v549
    %732 = vmatprep.subr.mxu0 %v553
    %733 = vmatpush1.msra.mxu0 %v552
    %734 = vmatprep.subr.mxu0 %v556
    %735 = vmatpush1.msra.mxu0 %v555
    %736 = vmatprep.subr.mxu0 %v559
    %737 = vmatpush1.msra.mxu0 %v558
    %738 = vmatprep.subr.mxu0 %v562
    %739 = vmatpush1.msra.mxu0 %v561
    %740 = vmatprep.subr.mxu0 %v565
    %741 = vmatpush1.msra.mxu0 %v564
    %742 = vmatprep.subr.mxu0 %v568
    %743 = vmatpush1.msra.mxu0 %v567
    %744 = vmatprep.subr.mxu0 %v571
    %745 = vmatpush1.msra.mxu0 %v570
    %746 = vmatprep.subr.mxu0 %v574
    %747 = vmatpush1.msra.mxu0 %v573
    %748 = vmatprep.subr.mxu0 %v577
    %749 = vmatpush1.msra.mxu0 %v576
    %750 = vmatprep.subr.mxu0 %v580
    %751 = vmatpush1.msra.mxu0 %v579
    %752 = vmatprep.subr.mxu0 %v583
    %753 = vmatpush1.msra.mxu0 %v582
    %754 = vmatprep.subr.mxu0 %v586
    %755 = vmatpush1.msra.mxu0 %v585
    %756 = vmatprep.subr.mxu0 %v589
    %757 = vmatpush1.msra.mxu0 %v588
    %758 = vmatprep.subr.mxu0 %v592
    %759 = vmatpush1.msra.mxu0 %v591
    %760 = vmatprep.subr.mxu0 %v595
    %761 = vmatpush1.msra.mxu0 %v594
    %762 = vmatprep.subr.mxu0 %v598
    %763 = vmatpush1.msra.mxu0 %v597
    %764 = vmatprep.subr.mxu0 %v601
    %765 = vmatpush1.msra.mxu0 %v600
    %766 = vmatprep.subr.mxu0 %v604
    %767 = vmatpush1.msra.mxu0 %v603
    %768 = vmatprep.subr.mxu0 %v607
    %769 = vmatpush1.msra.mxu0 %v606
    %770 = vmatprep.subr.mxu0 %v610
    %771 = vmatpush1.msra.mxu0 %v609
    %772 = vmatprep.subr.mxu0 %v613
    %773 = vmatpush1.msra.mxu0 %v612
    %774 = vmatprep.subr.mxu0 %v616
    %775 = vmatpush1.msra.mxu0 %v615
    %776 = vmatprep.subr.mxu0 %v619
    %777 = vmatpush1.msra.mxu0 %v618
    %778 = vmatprep.subr.mxu0 %v622
    %779 = vmatpush1.msra.mxu0 %v621
    %780 = vmatprep.subr.mxu0 %v625
    %781 = vmatpush1.msra.mxu0 %v624
    %782 = vmatprep.subr.mxu0 %v628
    %783 = vmatpush1.msra.mxu0 %v627
    %784 = vmatprep.subr.mxu0 %v631
    %785 = vmatpush1.msra.mxu0 %v630
    %786 = vmatprep.subr.mxu0 %v634
    %787 = vmatpush1.msra.mxu0 %v633
    %788 = vmatprep.mubr.f32.mxu0 %v443
    %789 = vmatmul.mubr.f32.gmra.mrb[0].mxu0 %v442
    %v790 = vpop.f32.mrb[0].mxu0
    %v791 = vadd.f32 %v720, %v790
    %v792 = vpop.f32.mrb[0].mxu0
    %v793 = vadd.f32 %v722, %v792
    %794 = vdwg.mxu0
    %795 = vmatprep.subr.mxu0 0.0
    %796 = vmatpush1.msra.mxu0 %v446
    %797 = vmatprep.subr.mxu0 0.0
    %798 = vmatpush1.msra.mxu0 %v449
    %799 = vmatprep.subr.mxu0 0.0
    %800 = vmatpush1.msra.mxu0 %v452
    %801 = vmatprep.subr.mxu0 0.0
    %802 = vmatpush1.msra.mxu0 %v455
    %803 = vmatprep.subr.mxu0 0.0
    %804 = vmatpush1.msra.mxu0 %v458
    %805 = vmatprep.subr.mxu0 0.0
    %806 = vmatpush1.msra.mxu0 %v461
    %807 = vmatprep.subr.mxu0 0.0
    %808 = vmatpush1.msra.mxu0 %v464
    %809 = vmatprep.subr.mxu0 0.0
    %810 = vmatpush1.msra.mxu0 %v467
    %811 = vmatprep.subr.mxu0 0.0
    %812 = vmatpush1.msra.mxu0 %v470
    %813 = vmatprep.subr.mxu0 0.0
    %814 = vmatpush1.msra.mxu0 %v473
    %815 = vmatprep.subr.mxu0 0.0
    %816 = vmatpush1.msra.mxu0 %v476
    %817 = vmatprep.subr.mxu0 0.0
    %818 = vmatpush1.msra.mxu0 %v479
    %819 = vmatprep.subr.mxu0 0.0
    %820 = vmatpush1.msra.mxu0 %v482
    %821 = vmatprep.subr.mxu0 0.0
    %822 = vmatpush1.msra.mxu0 %v485
    %823 = vmatprep.subr.mxu0 0.0
    %824 = vmatpush1.msra.mxu0 %v488
    %825 = vmatprep.subr.mxu0 0.0
    %826 = vmatpush1.msra.mxu0 %v491
    %827 = vmatprep.subr.mxu0 0.0
    %828 = vmatpush1.msra.mxu0 %v494
    %829 = vmatprep.subr.mxu0 0.0
    %830 = vmatpush1.msra.mxu0 %v497
    %831 = vmatprep.subr.mxu0 0.0
    %832 = vmatpush1.msra.mxu0 %v500
    %833 = vmatprep.subr.mxu0 0.0
    %834 = vmatpush1.msra.mxu0 %v503
    %835 = vmatprep.subr.mxu0 0.0
    %836 = vmatpush1.msra.mxu0 %v506
    %837 = vmatprep.subr.mxu0 0.0
    %838 = vmatpush1.msra.mxu0 %v509
    %839 = vmatprep.subr.mxu0 0.0
    %840 = vmatpush1.msra.mxu0 %v512
    %841 = vmatprep.subr.mxu0 0.0
    %842 = vmatpush1.msra.mxu0 %v515
    %843 = vmatprep.subr.mxu0 0.0
    %844 = vmatpush1.msra.mxu0 %v518
    %845 = vmatprep.subr.mxu0 0.0
    %846 = vmatpush1.msra.mxu0 %v521
    %847 = vmatprep.subr.mxu0 0.0
    %848 = vmatpush1.msra.mxu0 %v524
    %849 = vmatprep.subr.mxu0 0.0
    %850 = vmatpush1.msra.mxu0 %v527
    %851 = vmatprep.subr.mxu0 0.0
    %852 = vmatpush1.msra.mxu0 %v530
    %853 = vmatprep.subr.mxu0 0.0
    %854 = vmatpush1.msra.mxu0 %v533
    %855 = vmatprep.subr.mxu0 0.0
    %856 = vmatpush1.msra.mxu0 %v536
    %857 = vmatprep.subr.mxu0 0.0
    %858 = vmatpush1.msra.mxu0 %v539
    %859 = vmatprep.mubr.f32.mxu0 %v441
    %860 = vmatmul.mubr.f32.gmra.mrb[0].mxu0 %v440
    %v861 = vpop.f32.mrb[0].mxu0
    %v862 = vadd.f32 %v649, %v861
    %v863 = vpop.f32.mrb[0].mxu0
    %864 = vdwg.mxu0
    %865 = vmatprep.subr.mxu0 0.0
    %866 = vmatpush1.msra.mxu0 %v542
    %867 = vmatprep.subr.mxu0 0.0
    %868 = vmatpush1.msra.mxu0 %v545
    %869 = vmatprep.subr.mxu0 0.0
    %870 = vmatpush1.msra.mxu0 %v548
    %871 = vmatprep.subr.mxu0 0.0
    %872 = vmatpush1.msra.mxu0 %v551
    %873 = vmatprep.subr.mxu0 0.0
    %874 = vmatpush1.msra.mxu0 %v554
    %875 = vmatprep.subr.mxu0 0.0
    %876 = vmatpush1.msra.mxu0 %v557
    %877 = vmatprep.subr.mxu0 0.0
    %878 = vmatpush1.msra.mxu0 %v560
    %879 = vmatprep.subr.mxu0 0.0
    %880 = vmatpush1.msra.mxu0 %v563
    %881 = vmatprep.subr.mxu0 0.0
    %882 = vmatpush1.msra.mxu0 %v566
    %883 = vmatprep.subr.mxu0 0.0
    %884 = vmatpush1.msra.mxu0 %v569
    %885 = vmatprep.subr.mxu0 0.0
    %886 = vmatpush1.msra.mxu0 %v572
    %887 = vmatprep.subr.mxu0 0.0
    %888 = vmatpush1.msra.mxu0 %v575
    %889 = vmatprep.subr.mxu0 0.0
    %890 = vmatpush1.msra.mxu0 %v578
    %891 = vmatprep.subr.mxu0 0.0
    %892 = vmatpush1.msra.mxu0 %v581
    %893 = vmatprep.subr.mxu0 0.0
    %894 = vmatpush1.msra.mxu0 %v584
    %895 = vmatprep.subr.mxu0 0.0
    %896 = vmatpush1.msra.mxu0 %v587
    %897 = vmatprep.subr.mxu0 0.0
    %898 = vmatpush1.msra.mxu0 %v590
    %899 = vmatprep.subr.mxu0 0.0
    %900 = vmatpush1.msra.mxu0 %v593
    %901 = vmatprep.subr.mxu0 0.0
    %902 = vmatpush1.msra.mxu0 %v596
    %903 = vmatprep.subr.mxu0 0.0
    %904 = vmatpush1.msra.mxu0 %v599
    %905 = vmatprep.subr.mxu0 0.0
    %906 = vmatpush1.msra.mxu0 %v602
    %907 = vmatprep.subr.mxu0 0.0
    %908 = vmatpush1.msra.mxu0 %v605
    %909 = vmatprep.subr.mxu0 0.0
    %910 = vmatpush1.msra.mxu0 %v608
    %911 = vmatprep.subr.mxu0 0.0
    %912 = vmatpush1.msra.mxu0 %v611
    %913 = vmatprep.subr.mxu0 0.0
    %914 = vmatpush1.msra.mxu0 %v614
    %915 = vmatprep.subr.mxu0 0.0
    %916 = vmatpush1.msra.mxu0 %v617
    %917 = vmatprep.subr.mxu0 0.0
    %918 = vmatpush1.msra.mxu0 %v620
    %919 = vmatprep.subr.mxu0 0.0
    %920 = vmatpush1.msra.mxu0 %v623
    %921 = vmatprep.subr.mxu0 0.0
    %922 = vmatpush1.msra.mxu0 %v626
    %923 = vmatprep.subr.mxu0 0.0
    %924 = vmatpush1.msra.mxu0 %v629
    %925 = vmatprep.subr.mxu0 0.0
    %926 = vmatpush1.msra.mxu0 %v632
    %927 = vmatprep.subr.mxu0 0.0
    %928 = vmatpush1.msra.mxu0 %v635
    %929 = vmatprep.mubr.f32.mxu0 %v443
    %930 = vmatmul.mubr.f32.gmra.mrb[0].mxu0 %v442
    %v931 = vpop.f32.mrb[0].mxu0
    %v932 = vadd.f32 %v862, %v931
    %v933 = vpop.f32.mrb[0].mxu0
    %934 = vdwg.mxu0
    %v935 = vmin.f32 %v791, 20.0
    %v936 = vmin.f32 %v793, 20.0
    %v937 = vmin.f32 %v932, 20.0
    %v938 = vmul.f32 %v935, 1.442695
    %v939 = vpow.pop %v938
    %v940 = vmul.f32 %v936, 1.442695
    %v941 = vpow.pop %v940
    %v942 = vmul.f32 %v937, 1.442695
    %v943 = vpow.pop %v942
    %v944 = vadd.f32 %v939, 1.0
    %v945 = vadd.f32 %v941, 1.0
    %v946 = vadd.f32 %v943, 1.0
    %v947 = vmul.f32 %v944, %v944
    %v948 = vmul.f32 %v945, %v945
    %v949 = vmul.f32 %v946, %v946
    %v950 = vadd.f32 %v947, 1.0
    %v951 = vadd.f32 %v948, 1.0
    %v952 = vadd.f32 %v949, 1.0
    %v953 = vrcp.pop %v950
    %v954 = vrcp.pop %v951
    %v955 = vrcp.pop %v952
    %v956 = vmul.f32 %v950, %v953
    %v957 = vmul.f32 %v951, %v954
    %v958 = vmul.f32 %v952, %v955
    %v959 = vsub.f32 2.0, %v956
    %v960 = vsub.f32 2.0, %v957
    %v961 = vsub.f32 2.0, %v958
    %v962 = vmul.f32 %v953, %v959
    %v963 = vmul.f32 %v954, %v960
    %v964 = vmul.f32 %v955, %v961
    %v965 = vsub.f32 %v947, 1.0
    %v966 = vsub.f32 %v948, 1.0
    %v967 = vsub.f32 %v949, 1.0
    %v968 = vmul.f32 %v965, %v962
    %v969 = vmul.f32 %v966, %v963
    %v970 = vmul.f32 %v967, %v964
    %vm971 = vcmp.gt.f32.partialorder %v791, 20.0
    %vm972 = vcmp.gt.f32.partialorder %v793, 20.0
    %vm973 = vcmp.gt.f32.partialorder %v932, 20.0
    %v974 = vmul.f32 %v791, %v968
    %v975 = vmul.f32 %v793, %v969
    %v976 = vmul.f32 %v932, %v970
    %v977 = vsel %vm971, %v791, %v974
    %v978 = vsel %vm972, %v793, %v975
    %v979 = vsel %vm973, %v932, %v976
    %v980 = vld [vmem:[#allocation8] sm:$0xff]
    %v981 = vld [vmem:[#allocation8 + $0x8] sm:$0xff]
    %v982 = vld [vmem:[#allocation8 + $0x10] sm:$0xff]
    %v983 = vld [vmem:[#allocation8 + $0x18] sm:$0xff]
    %v984 = vld [vmem:[#allocation8 + $0x20] sm:$0xff]
    %v985 = vld [vmem:[#allocation8 + $0x28] sm:$0xff]
    %v986 = vld [vmem:[#allocation8 + $0x30] sm:$0xff]
    %v987 = vld [vmem:[#allocation8 + $0x38] sm:$0xff]
    %v988 = vld [vmem:[#allocation8 + $0x40] sm:$0xff]
    %v989 = vld [vmem:[#allocation8 + $0x48] sm:$0xff]
    %v990 = vld [vmem:[#allocation8 + $0x50] sm:$0xff]
    %v991 = vld [vmem:[#allocation8 + $0x58] sm:$0xff]
    %v992 = vld [vmem:[#allocation8 + $0x60] sm:$0xff]
    %v993 = vld [vmem:[#allocation8 + $0x68] sm:$0xff]
    %v994 = vld [vmem:[#allocation8 + $0x70] sm:$0xff]
    %v995 = vld [vmem:[#allocation8 + $0x78] sm:$0xff]
    %v996 = vld [vmem:[#allocation8 + $0x80] sm:$0xff]
    %v997 = vld [vmem:[#allocation8 + $0x88] sm:$0xff]
    %v998 = vld [vmem:[#allocation8 + $0x90] sm:$0xff]
    %v999 = vld [vmem:[#allocation8 + $0x98] sm:$0xff]
    %v1000 = vld [vmem:[#allocation8 + $0xa0] sm:$0xff]
    %v1001 = vld [vmem:[#allocation8 + $0xa8] sm:$0xff]
    %v1002 = vld [vmem:[#allocation8 + $0xb0] sm:$0xff]
    %v1003 = vld [vmem:[#allocation8 + $0xb8] sm:$0xff]
    %v1004 = vld [vmem:[#allocation8 + $0xc0] sm:$0xff]
    %v1005 = vld [vmem:[#allocation8 + $0xc8] sm:$0xff]
    %v1006 = vld [vmem:[#allocation8 + $0xd0] sm:$0xff]
    %v1007 = vld [vmem:[#allocation8 + $0xd8] sm:$0xff]
    %v1008 = vld [vmem:[#allocation8 + $0xe0] sm:$0xff]
    %v1009 = vld [vmem:[#allocation8 + $0xe8] sm:$0xff]
    %v1010 = vld [vmem:[#allocation8 + $0xf0] sm:$0xff]
    %v1011 = vld [vmem:[#allocation8 + $0xf8] sm:$0xff]
    %v1012 = vld [vmem:[#allocation8 + $0x100] sm:$0xff]
    %v1013 = vld [vmem:[#allocation8 + $0x108] sm:$0xff]
    %v1014 = vld [vmem:[#allocation8 + $0x110] sm:$0xff]
    %v1015 = vld [vmem:[#allocation8 + $0x118] sm:$0xff]
    %v1016 = vld [vmem:[#allocation8 + $0x120] sm:$0xff]
    %v1017 = vld [vmem:[#allocation8 + $0x128] sm:$0xff]
    %v1018 = vld [vmem:[#allocation8 + $0x130] sm:$0xff]
    %v1019 = vld [vmem:[#allocation8 + $0x138] sm:$0xff]
    %v1020 = vld [vmem:[#allocation8 + $0x140] sm:$0xff]
    %v1021 = vld [vmem:[#allocation8 + $0x148] sm:$0xff]
    %v1022 = vld [vmem:[#allocation8 + $0x150] sm:$0xff]
    %v1023 = vld [vmem:[#allocation8 + $0x158] sm:$0xff]
    %v1024 = vld [vmem:[#allocation8 + $0x160] sm:$0xff]
    %v1025 = vld [vmem:[#allocation8 + $0x168] sm:$0xff]
    %v1026 = vld [vmem:[#allocation8 + $0x170] sm:$0xff]
    %v1027 = vld [vmem:[#allocation8 + $0x178] sm:$0xff]
    %v1028 = vld [vmem:[%s6] sm:$0x1]
    %1029 = vmatprep.subr.mxu0 0.0
    %1030 = vmatpush1.msra.mxu0 %v980
    %1031 = vmatprep.subr.mxu0 0.0
    %1032 = vmatpush1.msra.mxu0 %v981
    %1033 = vmatprep.subr.mxu0 0.0
    %1034 = vmatpush1.msra.mxu0 %v982
    %1035 = vmatprep.subr.mxu0 0.0
    %1036 = vmatpush1.msra.mxu0 %v983
    %1037 = vmatprep.subr.mxu0 0.0
    %1038 = vmatpush1.msra.mxu0 %v984
    %1039 = vmatprep.subr.mxu0 0.0
    %1040 = vmatpush1.msra.mxu0 %v985
    %1041 = vmatprep.subr.mxu0 0.0
    %1042 = vmatpush1.msra.mxu0 %v986
    %1043 = vmatprep.subr.mxu0 0.0
    %1044 = vmatpush1.msra.mxu0 %v987
    %1045 = vmatprep.subr.mxu0 0.0
    %1046 = vmatpush1.msra.mxu0 %v988
    %1047 = vmatprep.subr.mxu0 0.0
    %1048 = vmatpush1.msra.mxu0 %v989
    %1049 = vmatprep.subr.mxu0 0.0
    %1050 = vmatpush1.msra.mxu0 %v990
    %1051 = vmatprep.subr.mxu0 0.0
    %1052 = vmatpush1.msra.mxu0 %v991
    %1053 = vmatprep.subr.mxu0 0.0
    %1054 = vmatpush1.msra.mxu0 %v992
    %1055 = vmatprep.subr.mxu0 0.0
    %1056 = vmatpush1.msra.mxu0 %v993
    %1057 = vmatprep.subr.mxu0 0.0
    %1058 = vmatpush1.msra.mxu0 %v994
    %1059 = vmatprep.subr.mxu0 0.0
    %1060 = vmatpush1.msra.mxu0 %v995
    %1061 = vmatprep.subr.mxu0 0.0
    %1062 = vmatpush1.msra.mxu0 %v996
    %1063 = vmatprep.subr.mxu0 0.0
    %1064 = vmatpush1.msra.mxu0 %v997
    %1065 = vmatprep.subr.mxu0 0.0
    %1066 = vmatpush1.msra.mxu0 %v998
    %1067 = vmatprep.subr.mxu0 0.0
    %1068 = vmatpush1.msra.mxu0 %v999
    %1069 = vmatprep.subr.mxu0 0.0
    %1070 = vmatpush1.msra.mxu0 %v1000
    %1071 = vmatprep.subr.mxu0 0.0
    %1072 = vmatpush1.msra.mxu0 %v1001
    %1073 = vmatprep.subr.mxu0 0.0
    %1074 = vmatpush1.msra.mxu0 %v1002
    %1075 = vmatprep.subr.mxu0 0.0
    %1076 = vmatpush1.msra.mxu0 %v1003
    %1077 = vmatprep.subr.mxu0 0.0
    %1078 = vmatpush1.msra.mxu0 %v1004
    %1079 = vmatprep.subr.mxu0 0.0
    %1080 = vmatpush1.msra.mxu0 %v1005
    %1081 = vmatprep.subr.mxu0 0.0
    %1082 = vmatpush1.msra.mxu0 %v1006
    %1083 = vmatprep.subr.mxu0 0.0
    %1084 = vmatpush1.msra.mxu0 %v1007
    %1085 = vmatprep.subr.mxu0 0.0
    %1086 = vmatpush1.msra.mxu0 %v1008
    %1087 = vmatprep.subr.mxu0 0.0
    %1088 = vmatpush1.msra.mxu0 %v1009
    %1089 = vmatprep.subr.mxu0 0.0
    %1090 = vmatpush1.msra.mxu0 %v1010
    %1091 = vmatprep.subr.mxu0 0.0
    %1092 = vmatpush1.msra.mxu0 %v1011
    %1093 = vmatprep.mubr.f32.mxu0 %v978
    %1094 = vmatmul.mubr.f32.gmra.mrb[0].mxu0 %v977
    %v1095 = vpop.f32.mrb[0].mxu0
    %v1096 = vadd.f32 %v1028, %v1095
    %v1097 = vpop.f32.mrb[0].mxu0
    %1098 = vdwg.mxu0
    %1099 = vmatprep.subr.mxu0 0.0
    %1100 = vmatpush1.msra.mxu0 %v1012
    %1101 = vmatprep.subr.mxu0 0.0
    %1102 = vmatpush1.msra.mxu0 %v1013
    %1103 = vmatprep.subr.mxu0 0.0
    %1104 = vmatpush1.msra.mxu0 %v1014
    %1105 = vmatprep.subr.mxu0 0.0
    %1106 = vmatpush1.msra.mxu0 %v1015
    %1107 = vmatprep.subr.mxu0 0.0
    %1108 = vmatpush1.msra.mxu0 %v1016
    %1109 = vmatprep.subr.mxu0 0.0
    %1110 = vmatpush1.msra.mxu0 %v1017
    %1111 = vmatprep.subr.mxu0 0.0
    %1112 = vmatpush1.msra.mxu0 %v1018
    %1113 = vmatprep.subr.mxu0 0.0
    %1114 = vmatpush1.msra.mxu0 %v1019
    %1115 = vmatprep.subr.mxu0 0.0
    %1116 = vmatpush1.msra.mxu0 %v1020
    %1117 = vmatprep.subr.mxu0 0.0
    %1118 = vmatpush1.msra.mxu0 %v1021
    %1119 = vmatprep.subr.mxu0 0.0
    %1120 = vmatpush1.msra.mxu0 %v1022
    %1121 = vmatprep.subr.mxu0 0.0
    %1122 = vmatpush1.msra.mxu0 %v1023
    %1123 = vmatprep.subr.mxu0 0.0
    %1124 = vmatpush1.msra.mxu0 %v1024
    %1125 = vmatprep.subr.mxu0 0.0
    %1126 = vmatpush1.msra.mxu0 %v1025
    %1127 = vmatprep.subr.mxu0 0.0
    %1128 = vmatpush1.msra.mxu0 %v1026
    %1129 = vmatprep.subr.mxu0 0.0
    %1130 = vmatpush1.msra.mxu0 %v1027
    %1131 = vmatprep.subr.mxu0 0.0
    %1132 = vmatpush1.msra.mxu0 0.0
    %1133 = vmatprep.subr.mxu0 0.0
    %1134 = vmatpush1.msra.mxu0 0.0
    %1135 = vmatprep.subr.mxu0 0.0
    %1136 = vmatpush1.msra.mxu0 0.0
    %1137 = vmatprep.subr.mxu0 0.0
    %1138 = vmatpush1.msra.mxu0 0.0
    %1139 = vmatprep.subr.mxu0 0.0
    %1140 = vmatpush1.msra.mxu0 0.0
    %1141 = vmatprep.subr.mxu0 0.0
    %1142 = vmatpush1.msra.mxu0 0.0
    %1143 = vmatprep.subr.mxu0 0.0
    %1144 = vmatpush1.msra.mxu0 0.0
    %1145 = vmatprep.subr.mxu0 0.0
    %1146 = vmatpush1.msra.mxu0 0.0
    %1147 = vmatprep.subr.mxu0 0.0
    %1148 = vmatpush1.msra.mxu0 0.0
    %1149 = vmatprep.subr.mxu0 0.0
    %1150 = vmatpush1.msra.mxu0 0.0
    %1151 = vmatprep.subr.mxu0 0.0
    %1152 = vmatpush1.msra.mxu0 0.0
    %1153 = vmatprep.subr.mxu0 0.0
    %1154 = vmatpush1.msra.mxu0 0.0
    %1155 = vmatprep.subr.mxu0 0.0
    %1156 = vmatpush1.msra.mxu0 0.0
    %1157 = vmatprep.subr.mxu0 0.0
    %1158 = vmatpush1.msra.mxu0 0.0
    %1159 = vmatprep.subr.mxu0 0.0
    %1160 = vmatpush1.msra.mxu0 0.0
    %1161 = vmatprep.subr.mxu0 0.0
    %1162 = vmatpush1.msra.mxu0 0.0
    %1163 = vmatprep.mubr.f32.mxu0 0.0
    %1164 = vmatmul.mubr.f32.gmra.mrb[0].mxu0 %v979
    %v1165 = vpop.f32.mrb[0].mxu0
    %v1166 = vadd.f32 %v1096, %v1165
    %v1167 = vpop.f32.mrb[0].mxu0
    %1168 = vdwg.mxu0
    %1169 = vst [vmem:[#allocation10] sm:$0x1] %v1166
    // Predicated region
    $region46: #{tpu_custom_call.1} parent=1 // pred_check
      _
    $region47: #{tpu_custom_call.1} parent=1 // pred_check_branch
      %1171 = sbr.rel (0) target = $region49
    $region48: #{tpu_custom_call.1} parent=1 // pred_region
      %s1173 = ssub.s32 16, 16
      %1174 = vsyncadd [#allocation4], %s1173
      %s1176 = sshll.u32 [#allocation10], 4
      %s1177 = int_to_ptr.vmem [resolvable:$true] %s1176
      %1179 = dma.vmem_to_hbm [thread:$0]  %s1177, 16, %s7, [#allocation4]
    $region49: #{tpu_custom_call.1} parent=1 // pred_fallthru
      _
    // Predicated region
    $region50: #{tpu_custom_call.1} parent=1 // pred_check
      _
    $region51: #{tpu_custom_call.1} parent=1 // pred_check_branch
      %1181 = sbr.rel (0) target = $region53
    $region52: #{tpu_custom_call.1} parent=1 // pred_region
      %1182 = dma.done [#allocation4], 16
    $region53: #{tpu_custom_call.1} parent=1 // pred_fallthru
      _
    %1183 = vsyncpa [#allocation3], 1
    %1184 = vsyncpa [#allocation6], 1
    %1185 = vsyncpa [#allocation9], 1
    %1186 = vsyncpa [#allocation4], 1

</llo_original>
